<compile_context>
chip_gen: v7x
topology: tpu7x:2x2x1
jax: 0.10.0
libtpu: 0.0.40
codegen_flags: <defaults>
</compile_context>

<pallas_src>
import math

import jax
import jax.numpy as jnp
from jax import lax
from jax.experimental import pallas as pl
from jax.experimental.pallas import tpu as pltpu

INPUT_SIZE = 70
HIDDEN1 = 32
HIDDEN2 = 32
HIDDEN3 = 16
HIDDEN4 = 16
LATENT = 30
BN_EPS = 1e-5

VEC_ROWS = 9            # g1, be1, g2, be2, g3, be3, g4, be4, bhead
VEC_LANES = 64          # >= max(32, 2*LATENT = 60)
OUT_LANES = 128         # lane-dense packed output: [latent | mean | logvar | pad]


def encoder_kernel(x_ref, eps_ref, w1_ref, w2_ref, w3_ref, w4_ref,
                   whead_ref, vec_ref, out_ref):
    def linear(h, w_ref):
        # Bias-free: hidden-layer biases are cancelled by training-mode BN.
        # bf16 operands, f32 accumulation on the MXU.
        return jnp.dot(h.astype(jnp.bfloat16), w_ref[...],
                       preferred_element_type=jnp.float32)

    def bn_relu(h, row, width):
        # Training-mode BatchNorm1d over the batch axis with the affine folded
        # into a single per-feature scale:  relu((h - mu) * (g * rsqrt(var+eps)) + beta)
        g = vec_ref[row:row + 1, 0:width]
        be = vec_ref[row + 1:row + 2, 0:width]
        mu = jnp.mean(h, axis=0, keepdims=True)
        d = h - mu                                          # computed once, reused
        var = jnp.mean(d * d, axis=0, keepdims=True)        # biased variance
        s = g * lax.rsqrt(var + BN_EPS)
        return jnp.maximum(d * s + be, 0.0)

    x = x_ref[...]
    h1 = bn_relu(linear(x, w1_ref), 0, HIDDEN1)
    h2 = bn_relu(linear(h1, w2_ref), 2, HIDDEN2)
    h3 = bn_relu(linear(h2, w3_ref), 4, HIDDEN3)
    h4 = bn_relu(linear(h3, w4_ref), 6, HIDDEN4)

    # Fused mean|logvar head: one (16, 60) matmul instead of two (16, 30).
    bhead = vec_ref[8:9, 0:2 * LATENT]
    head = jnp.dot(h4.astype(jnp.bfloat16), whead_ref[...],
                   preferred_element_type=jnp.float32) + bhead
    mean = head[:, 0:LATENT]
    logvar = head[:, LATENT:2 * LATENT]

    std = jnp.exp(0.5 * logvar)
    latent = eps_ref[...] * std + mean

    # Single lane-dense (B, 128) store: [latent | mean | logvar | zero pad].
    pad = jnp.zeros((latent.shape[0], OUT_LANES - 3 * LATENT), jnp.float32)
    out_ref[...] = jnp.concatenate([latent, head, pad], axis=1)


def encoder_forward(x, eps, packed):
    """x: (B, 70) f32, eps: (B, 30) f32, packed: (w1,w2,w3,w4,whead bf16, vec f32)."""
    B = x.shape[0]
    w1, w2, w3, w4, whead, vec = packed
    vmem = pl.BlockSpec(memory_space=pltpu.MemorySpace.VMEM)
    out = pl.pallas_call(
        encoder_kernel,
        out_shape=jax.ShapeDtypeStruct((B, OUT_LANES), jnp.float32),
        in_specs=[vmem] * 8,
        out_specs=vmem,
    )(x, eps, w1, w2, w3, w4, whead, vec)
    latent = out[:, 0:LATENT]
    mean = out[:, LATENT:2 * LATENT]
    logvar = out[:, 2 * LATENT:3 * LATENT]
    return latent, mean, logvar


# ----------------------------- parameter setup ------------------------------

def _linear_weight(key, fan_in, fan_out):
    # nn.Linear default: kaiming_uniform_(a=sqrt(5)) == U(-1/sqrt(fan_in), 1/sqrt(fan_in))
    bound = 1.0 / math.sqrt(fan_in)
    return jax.random.uniform(key, (fan_in, fan_out), jnp.float32, -bound, bound)


def _xavier_uniform(key, fan_in, fan_out):
    bound = math.sqrt(6.0 / (fan_in + fan_out))
    return jax.random.uniform(key, (fan_in, fan_out), jnp.float32, -bound, bound)


def pack_params(w1, w2, w3, w4, wm, wl, bm, bl, gammas, betas):
    """Pack into 5 bf16 weight blocks + one (VEC_ROWS, VEC_LANES) f32 vector."""
    whead = jnp.concatenate([wm, wl], axis=1)               # (16, 60)
    rows = []
    for g, b in zip(gammas, betas):
        rows.append(g)
        rows.append(b)
    rows.append(jnp.concatenate([bm, bl]))                  # head bias (60,)
    vec = jnp.zeros((VEC_ROWS, VEC_LANES), jnp.float32)
    for i, r in enumerate(rows):
        vec = vec.at[i, :r.shape[0]].set(r)
    weights = tuple(w.astype(jnp.bfloat16) for w in (w1, w2, w3, w4, whead))
    return (*weights, vec)


def make_params(key):
    k = jax.random.split(key, 8)
    w1 = _linear_weight(k[0], INPUT_SIZE, HIDDEN1)
    w2 = _linear_weight(k[1], HIDDEN1, HIDDEN2)
    w3 = _linear_weight(k[2], HIDDEN2, HIDDEN3)
    w4 = _linear_weight(k[3], HIDDEN3, HIDDEN4)
    # Hidden-layer linear biases are intentionally omitted: they are exactly
    # cancelled by the training-mode BatchNorm mean subtraction.
    wm = _xavier_uniform(k[4], HIDDEN4, LATENT)
    wl = _xavier_uniform(k[5], HIDDEN4, LATENT)
    bound = 1.0 / math.sqrt(HIDDEN4)
    bm = jax.random.uniform(k[6], (LATENT,), jnp.float32, -bound, bound)
    bl = jax.random.uniform(k[7], (LATENT,), jnp.float32, -bound, bound)
    gammas = [jnp.ones((h,), jnp.float32) for h in (HIDDEN1, HIDDEN2, HIDDEN3, HIDDEN4)]
    betas = [jnp.zeros((h,), jnp.float32) for h in (HIDDEN1, HIDDEN2, HIDDEN3, HIDDEN4)]
    return pack_params(w1, w2, w3, w4, wm, wl, bm, bl, gammas, betas)


if __name__ == "__main__":
    key = jax.random.PRNGKey(0)
    k_x, k_eps, k_p = jax.random.split(key, 3)

    B = 8  # small, sublane-aligned batch
    x = jax.random.normal(k_x, (B, INPUT_SIZE), jnp.float32)
    eps = jax.random.normal(k_eps, (B, LATENT), jnp.float32)
    packed = make_params(k_p)

    latent, mean, logvar = encoder_forward(x, eps, packed)
    jax.block_until_ready((latent, mean, logvar))

    assert latent.shape == (B, LATENT)
    assert mean.shape == (B, LATENT)
    assert logvar.shape == (B, LATENT)
    print("KERNEL_OK")
</pallas_src>

<mosaic_0001>
module attributes {stable_mosaic.version = 11 : i64} {
  func.func @encoder_kernel(%arg0: memref<8x70xf32, #tpu.memory_space<vmem>>, %arg1: memref<8x30xf32, #tpu.memory_space<vmem>>, %arg2: memref<70x32xbf16, #tpu.memory_space<vmem>>, %arg3: memref<32x32xbf16, #tpu.memory_space<vmem>>, %arg4: memref<32x16xbf16, #tpu.memory_space<vmem>>, %arg5: memref<16x16xbf16, #tpu.memory_space<vmem>>, %arg6: memref<16x60xbf16, #tpu.memory_space<vmem>>, %arg7: memref<9x64xf32, #tpu.memory_space<vmem>>, %arg8: memref<8x128xf32, #tpu.memory_space<vmem>>) attributes {dimension_semantics = [], scalar_prefetch = 0 : i64, scratch_operands = 0 : i64, tpu.core_type = #tpu.core_type<tc>} {
    %c0 = arith.constant 0 : index
    %c0_0 = arith.constant 0 : index
    %0 = vector.load %arg0[%c0, %c0_0] : memref<8x70xf32, #tpu.memory_space<vmem>>, vector<8x70xf32>
    %1 = arith.truncf %0 : vector<8x70xf32> to vector<8x70xbf16>
    %c0_1 = arith.constant 0 : index
    %c0_2 = arith.constant 0 : index
    %2 = vector.load %arg2[%c0_1, %c0_2] : memref<70x32xbf16, #tpu.memory_space<vmem>>, vector<70x32xbf16>
    %cst = arith.constant dense<0.000000e+00> : vector<8x32xf32>
    %3 = tpu.matmul %1, %2, %cst {dimension_numbers = #tpu.dot_dimension_numbers<[1], [0], [0], [1], [0, 0, 1, 1], [], []>} : vector<8x70xbf16>, vector<70x32xbf16>, vector<8x32xf32> -> vector<8x32xf32>
    %c0_3 = arith.constant 0 : index
    %c0_4 = arith.constant 0 : index
    %4 = vector.load %arg7[%c0_3, %c0_4] : memref<9x64xf32, #tpu.memory_space<vmem>>, vector<1x32xf32>
    %c1 = arith.constant 1 : index
    %c0_5 = arith.constant 0 : index
    %5 = vector.load %arg7[%c1, %c0_5] : memref<9x64xf32, #tpu.memory_space<vmem>>, vector<1x32xf32>
    %cst_6 = arith.constant dense<0.000000e+00> : vector<32xf32>
    %6 = vector.multi_reduction <add>, %3, %cst_6 [0] : vector<8x32xf32> to vector<32xf32>
    %7 = vector.shape_cast %6 : vector<32xf32> to vector<1x32xf32>
    %cst_7 = arith.constant 8.000000e+00 : f32
    %8 = vector.broadcast %cst_7 : f32 to vector<1x32xf32>
    %9 = arith.divf %7, %8 : vector<1x32xf32>
    %10 = vector.broadcast %9 : vector<1x32xf32> to vector<8x32xf32>
    %11 = arith.subf %3, %10 : vector<8x32xf32>
    %12 = arith.mulf %11, %11 : vector<8x32xf32>
    %cst_8 = arith.constant dense<0.000000e+00> : vector<32xf32>
    %13 = vector.multi_reduction <add>, %12, %cst_8 [0] : vector<8x32xf32> to vector<32xf32>
    %14 = vector.shape_cast %13 : vector<32xf32> to vector<1x32xf32>
    %cst_9 = arith.constant 8.000000e+00 : f32
    %15 = vector.broadcast %cst_9 : f32 to vector<1x32xf32>
    %16 = arith.divf %14, %15 : vector<1x32xf32>
    %cst_10 = arith.constant 9.99999974E-6 : f32
    %17 = vector.broadcast %cst_10 : f32 to vector<1x32xf32>
    %18 = arith.addf %16, %17 : vector<1x32xf32>
    %19 = math.rsqrt %18 : vector<1x32xf32>
    %20 = arith.mulf %4, %19 : vector<1x32xf32>
    %21 = vector.broadcast %20 : vector<1x32xf32> to vector<8x32xf32>
    %22 = arith.mulf %11, %21 : vector<8x32xf32>
    %23 = vector.broadcast %5 : vector<1x32xf32> to vector<8x32xf32>
    %24 = arith.addf %22, %23 : vector<8x32xf32>
    %cst_11 = arith.constant 0.000000e+00 : f32
    %25 = vector.broadcast %cst_11 : f32 to vector<8x32xf32>
    %26 = arith.maximumf %24, %25 : vector<8x32xf32>
    %27 = arith.truncf %26 : vector<8x32xf32> to vector<8x32xbf16>
    %c0_12 = arith.constant 0 : index
    %c0_13 = arith.constant 0 : index
    %28 = vector.load %arg3[%c0_12, %c0_13] : memref<32x32xbf16, #tpu.memory_space<vmem>>, vector<32x32xbf16>
    %cst_14 = arith.constant dense<0.000000e+00> : vector<8x32xf32>
    %29 = tpu.matmul %27, %28, %cst_14 {dimension_numbers = #tpu.dot_dimension_numbers<[1], [0], [0], [1], [0, 0, 1, 1], [], []>} : vector<8x32xbf16>, vector<32x32xbf16>, vector<8x32xf32> -> vector<8x32xf32>
    %c2 = arith.constant 2 : index
    %c0_15 = arith.constant 0 : index
    %30 = vector.load %arg7[%c2, %c0_15] : memref<9x64xf32, #tpu.memory_space<vmem>>, vector<1x32xf32>
    %c3 = arith.constant 3 : index
    %c0_16 = arith.constant 0 : index
    %31 = vector.load %arg7[%c3, %c0_16] : memref<9x64xf32, #tpu.memory_space<vmem>>, vector<1x32xf32>
    %cst_17 = arith.constant dense<0.000000e+00> : vector<32xf32>
    %32 = vector.multi_reduction <add>, %29, %cst_17 [0] : vector<8x32xf32> to vector<32xf32>
    %33 = vector.shape_cast %32 : vector<32xf32> to vector<1x32xf32>
    %cst_18 = arith.constant 8.000000e+00 : f32
    %34 = vector.broadcast %cst_18 : f32 to vector<1x32xf32>
    %35 = arith.divf %33, %34 : vector<1x32xf32>
    %36 = vector.broadcast %35 : vector<1x32xf32> to vector<8x32xf32>
    %37 = arith.subf %29, %36 : vector<8x32xf32>
    %38 = arith.mulf %37, %37 : vector<8x32xf32>
    %cst_19 = arith.constant dense<0.000000e+00> : vector<32xf32>
    %39 = vector.multi_reduction <add>, %38, %cst_19 [0] : vector<8x32xf32> to vector<32xf32>
    %40 = vector.shape_cast %39 : vector<32xf32> to vector<1x32xf32>
    %cst_20 = arith.constant 8.000000e+00 : f32
    %41 = vector.broadcast %cst_20 : f32 to vector<1x32xf32>
    %42 = arith.divf %40, %41 : vector<1x32xf32>
    %cst_21 = arith.constant 9.99999974E-6 : f32
    %43 = vector.broadcast %cst_21 : f32 to vector<1x32xf32>
    %44 = arith.addf %42, %43 : vector<1x32xf32>
    %45 = math.rsqrt %44 : vector<1x32xf32>
    %46 = arith.mulf %30, %45 : vector<1x32xf32>
    %47 = vector.broadcast %46 : vector<1x32xf32> to vector<8x32xf32>
    %48 = arith.mulf %37, %47 : vector<8x32xf32>
    %49 = vector.broadcast %31 : vector<1x32xf32> to vector<8x32xf32>
    %50 = arith.addf %48, %49 : vector<8x32xf32>
    %cst_22 = arith.constant 0.000000e+00 : f32
    %51 = vector.broadcast %cst_22 : f32 to vector<8x32xf32>
    %52 = arith.maximumf %50, %51 : vector<8x32xf32>
    %53 = arith.truncf %52 : vector<8x32xf32> to vector<8x32xbf16>
    %c0_23 = arith.constant 0 : index
    %c0_24 = arith.constant 0 : index
    %54 = vector.load %arg4[%c0_23, %c0_24] : memref<32x16xbf16, #tpu.memory_space<vmem>>, vector<32x16xbf16>
    %cst_25 = arith.constant dense<0.000000e+00> : vector<8x16xf32>
    %55 = tpu.matmul %53, %54, %cst_25 {dimension_numbers = #tpu.dot_dimension_numbers<[1], [0], [0], [1], [0, 0, 1, 1], [], []>} : vector<8x32xbf16>, vector<32x16xbf16>, vector<8x16xf32> -> vector<8x16xf32>
    %c4 = arith.constant 4 : index
    %c0_26 = arith.constant 0 : index
    %56 = vector.load %arg7[%c4, %c0_26] : memref<9x64xf32, #tpu.memory_space<vmem>>, vector<1x16xf32>
    %c5 = arith.constant 5 : index
    %c0_27 = arith.constant 0 : index
    %57 = vector.load %arg7[%c5, %c0_27] : memref<9x64xf32, #tpu.memory_space<vmem>>, vector<1x16xf32>
    %cst_28 = arith.constant dense<0.000000e+00> : vector<16xf32>
    %58 = vector.multi_reduction <add>, %55, %cst_28 [0] : vector<8x16xf32> to vector<16xf32>
    %59 = vector.shape_cast %58 : vector<16xf32> to vector<1x16xf32>
    %cst_29 = arith.constant 8.000000e+00 : f32
    %60 = vector.broadcast %cst_29 : f32 to vector<1x16xf32>
    %61 = arith.divf %59, %60 : vector<1x16xf32>
    %62 = vector.broadcast %61 : vector<1x16xf32> to vector<8x16xf32>
    %63 = arith.subf %55, %62 : vector<8x16xf32>
    %64 = arith.mulf %63, %63 : vector<8x16xf32>
    %cst_30 = arith.constant dense<0.000000e+00> : vector<16xf32>
    %65 = vector.multi_reduction <add>, %64, %cst_30 [0] : vector<8x16xf32> to vector<16xf32>
    %66 = vector.shape_cast %65 : vector<16xf32> to vector<1x16xf32>
    %cst_31 = arith.constant 8.000000e+00 : f32
    %67 = vector.broadcast %cst_31 : f32 to vector<1x16xf32>
    %68 = arith.divf %66, %67 : vector<1x16xf32>
    %cst_32 = arith.constant 9.99999974E-6 : f32
    %69 = vector.broadcast %cst_32 : f32 to vector<1x16xf32>
    %70 = arith.addf %68, %69 : vector<1x16xf32>
    %71 = math.rsqrt %70 : vector<1x16xf32>
    %72 = arith.mulf %56, %71 : vector<1x16xf32>
    %73 = vector.broadcast %72 : vector<1x16xf32> to vector<8x16xf32>
    %74 = arith.mulf %63, %73 : vector<8x16xf32>
    %75 = vector.broadcast %57 : vector<1x16xf32> to vector<8x16xf32>
    %76 = arith.addf %74, %75 : vector<8x16xf32>
    %cst_33 = arith.constant 0.000000e+00 : f32
    %77 = vector.broadcast %cst_33 : f32 to vector<8x16xf32>
    %78 = arith.maximumf %76, %77 : vector<8x16xf32>
    %79 = arith.truncf %78 : vector<8x16xf32> to vector<8x16xbf16>
    %c0_34 = arith.constant 0 : index
    %c0_35 = arith.constant 0 : index
    %80 = vector.load %arg5[%c0_34, %c0_35] : memref<16x16xbf16, #tpu.memory_space<vmem>>, vector<16x16xbf16>
    %cst_36 = arith.constant dense<0.000000e+00> : vector<8x16xf32>
    %81 = tpu.matmul %79, %80, %cst_36 {dimension_numbers = #tpu.dot_dimension_numbers<[1], [0], [0], [1], [0, 0, 1, 1], [], []>} : vector<8x16xbf16>, vector<16x16xbf16>, vector<8x16xf32> -> vector<8x16xf32>
    %c6 = arith.constant 6 : index
    %c0_37 = arith.constant 0 : index
    %82 = vector.load %arg7[%c6, %c0_37] : memref<9x64xf32, #tpu.memory_space<vmem>>, vector<1x16xf32>
    %c7 = arith.constant 7 : index
    %c0_38 = arith.constant 0 : index
    %83 = vector.load %arg7[%c7, %c0_38] : memref<9x64xf32, #tpu.memory_space<vmem>>, vector<1x16xf32>
    %cst_39 = arith.constant dense<0.000000e+00> : vector<16xf32>
    %84 = vector.multi_reduction <add>, %81, %cst_39 [0] : vector<8x16xf32> to vector<16xf32>
    %85 = vector.shape_cast %84 : vector<16xf32> to vector<1x16xf32>
    %cst_40 = arith.constant 8.000000e+00 : f32
    %86 = vector.broadcast %cst_40 : f32 to vector<1x16xf32>
    %87 = arith.divf %85, %86 : vector<1x16xf32>
    %88 = vector.broadcast %87 : vector<1x16xf32> to vector<8x16xf32>
    %89 = arith.subf %81, %88 : vector<8x16xf32>
    %90 = arith.mulf %89, %89 : vector<8x16xf32>
    %cst_41 = arith.constant dense<0.000000e+00> : vector<16xf32>
    %91 = vector.multi_reduction <add>, %90, %cst_41 [0] : vector<8x16xf32> to vector<16xf32>
    %92 = vector.shape_cast %91 : vector<16xf32> to vector<1x16xf32>
    %cst_42 = arith.constant 8.000000e+00 : f32
    %93 = vector.broadcast %cst_42 : f32 to vector<1x16xf32>
    %94 = arith.divf %92, %93 : vector<1x16xf32>
    %cst_43 = arith.constant 9.99999974E-6 : f32
    %95 = vector.broadcast %cst_43 : f32 to vector<1x16xf32>
    %96 = arith.addf %94, %95 : vector<1x16xf32>
    %97 = math.rsqrt %96 : vector<1x16xf32>
    %98 = arith.mulf %82, %97 : vector<1x16xf32>
    %99 = vector.broadcast %98 : vector<1x16xf32> to vector<8x16xf32>
    %100 = arith.mulf %89, %99 : vector<8x16xf32>
    %101 = vector.broadcast %83 : vector<1x16xf32> to vector<8x16xf32>
    %102 = arith.addf %100, %101 : vector<8x16xf32>
    %cst_44 = arith.constant 0.000000e+00 : f32
    %103 = vector.broadcast %cst_44 : f32 to vector<8x16xf32>
    %104 = arith.maximumf %102, %103 : vector<8x16xf32>
    %c8 = arith.constant 8 : index
    %c0_45 = arith.constant 0 : index
    %105 = vector.load %arg7[%c8, %c0_45] : memref<9x64xf32, #tpu.memory_space<vmem>>, vector<1x60xf32>
    %106 = arith.truncf %104 : vector<8x16xf32> to vector<8x16xbf16>
    %c0_46 = arith.constant 0 : index
    %c0_47 = arith.constant 0 : index
    %107 = vector.load %arg6[%c0_46, %c0_47] : memref<16x60xbf16, #tpu.memory_space<vmem>>, vector<16x60xbf16>
    %cst_48 = arith.constant dense<0.000000e+00> : vector<8x60xf32>
    %108 = tpu.matmul %106, %107, %cst_48 {dimension_numbers = #tpu.dot_dimension_numbers<[1], [0], [0], [1], [0, 0, 1, 1], [], []>} : vector<8x16xbf16>, vector<16x60xbf16>, vector<8x60xf32> -> vector<8x60xf32>
    %109 = vector.broadcast %105 : vector<1x60xf32> to vector<8x60xf32>
    %110 = arith.addf %108, %109 : vector<8x60xf32>
    %111 = vector.extract_strided_slice %110 {offsets = [0, 0], sizes = [8, 30], strides = [1, 1]} : vector<8x60xf32> to vector<8x30xf32>
    %112 = vector.extract_strided_slice %110 {offsets = [0, 30], sizes = [8, 30], strides = [1, 1]} : vector<8x60xf32> to vector<8x30xf32>
    %cst_49 = arith.constant 5.000000e-01 : f32
    %113 = vector.broadcast %cst_49 : f32 to vector<8x30xf32>
    %114 = arith.mulf %113, %112 : vector<8x30xf32>
    %115 = math.exp %114 : vector<8x30xf32>
    %c0_50 = arith.constant 0 : index
    %c0_51 = arith.constant 0 : index
    %116 = vector.load %arg1[%c0_50, %c0_51] : memref<8x30xf32, #tpu.memory_space<vmem>>, vector<8x30xf32>
    %117 = arith.mulf %116, %115 : vector<8x30xf32>
    %118 = arith.addf %117, %111 : vector<8x30xf32>
    %cst_52 = arith.constant 0.000000e+00 : f32
    %119 = vector.broadcast %cst_52 : f32 to vector<8x38xf32>
    %120 = tpu.concatenate %118, %110, %119 in 1 : vector<8x30xf32>, vector<8x60xf32>, vector<8x38xf32> -> vector<8x128xf32>
    %c0_53 = arith.constant 0 : index
    %c0_54 = arith.constant 0 : index
    %121 = vector.load %arg8[%c0_53, %c0_54] : memref<8x128xf32, #tpu.memory_space<vmem>>, vector<8x128xf32>
    tpu.vector_store %arg8[%c0_53, %c0_54], %120 {strides = array<i32>} : memref<8x128xf32, #tpu.memory_space<vmem>>, vector<8x128xf32>,
    return
  }
}

</mosaic_0001>

<llo_original>
// kernel: tpu_custom_call.1
$region0: #{tpu_custom_call.1}
  #allocation0 [shape = 'u32[]', space=smem, size = 0x4, offset = 0x4, fixed_abs, tag = 'smem constant byte address 0x4 - core index']
  #allocation1 [shape = 'u32[144,128]{1,0:T(1,128)}', space=vmem, size = 0x12000, scoped, tag = 'internal scratch']
  %s0 = inlined_call_operand.vmem [shape: f32[8,70], index: 0, kind: input, shape index: {}]
  %s1 = inlined_call_operand.vmem [shape: f32[8,30], index: 1, kind: input, shape index: {}]
  %s2 = inlined_call_operand.vmem [shape: bf16[70,32], index: 2, kind: input, shape index: {}]
  %s3 = inlined_call_operand.vmem [shape: bf16[32,32], index: 3, kind: input, shape index: {}]
  %s4 = inlined_call_operand.vmem [shape: bf16[32,16], index: 4, kind: input, shape index: {}]
  %s5 = inlined_call_operand.vmem [shape: bf16[16,16], index: 5, kind: input, shape index: {}]
  %s6 = inlined_call_operand.vmem [shape: bf16[16,60], index: 6, kind: input, shape index: {}]
  %s7 = inlined_call_operand.vmem [shape: f32[9,64], index: 7, kind: input, shape index: {}]
  %s8 = inlined_call_operand.hbm [shape: f32[8,128], index: 8, kind: output, shape index: {}]
  %s9 = sld [smem:[#allocation0]]
  $region42: #{tpu_custom_call.1} parent=0
    _
  %s11 = ssub.s32 1, %s9
  %s12 = scalar_select 0, %s11, %s9
  $region1: #{tpu_custom_call.1} parent=0
    #allocation2 [shape = 'u8[4096]{0}', space=vmem, size = 0x1000, scoped, tag = 'output window, operand 0, single buffered']
    #allocation3 [shape = 's32[1]{0}', space=sflag, size = 0x4, scoped, tag = 'scoped memory for tpu_custom_call.1']
    %13 = vsyncpa [#allocation3], 0
    // Predicated region
    $region2: #{tpu_custom_call.1} parent=1 // pred_check
      _
    $region3: #{tpu_custom_call.1} parent=1 // pred_check_branch
      %15 = sbr.rel (0) target = $region5
    $region4: #{tpu_custom_call.1} parent=1 // pred_region
      _
    $region5: #{tpu_custom_call.1} parent=1 // pred_fallthru
      _
    // Predicated region
    $region6: #{tpu_custom_call.1} parent=1 // pred_check
      _
    $region7: #{tpu_custom_call.1} parent=1 // pred_check_branch
      %17 = sbr.rel (0) target = $region9
    $region8: #{tpu_custom_call.1} parent=1 // pred_region
      _
    $region9: #{tpu_custom_call.1} parent=1 // pred_fallthru
      _
    // Predicated region
    $region10: #{tpu_custom_call.1} parent=1 // pred_check
      _
    $region11: #{tpu_custom_call.1} parent=1 // pred_check_branch
      %19 = sbr.rel (0) target = $region13
    $region12: #{tpu_custom_call.1} parent=1 // pred_region
      _
    $region13: #{tpu_custom_call.1} parent=1 // pred_fallthru
      _
    // Predicated region
    $region14: #{tpu_custom_call.1} parent=1 // pred_check
      _
    $region15: #{tpu_custom_call.1} parent=1 // pred_check_branch
      %21 = sbr.rel (0) target = $region17
    $region16: #{tpu_custom_call.1} parent=1 // pred_region
      _
    $region17: #{tpu_custom_call.1} parent=1 // pred_fallthru
      _
    // Predicated region
    $region18: #{tpu_custom_call.1} parent=1 // pred_check
      _
    $region19: #{tpu_custom_call.1} parent=1 // pred_check_branch
      %23 = sbr.rel (0) target = $region21
    $region20: #{tpu_custom_call.1} parent=1 // pred_region
      _
    $region21: #{tpu_custom_call.1} parent=1 // pred_fallthru
      _
    // Predicated region
    $region22: #{tpu_custom_call.1} parent=1 // pred_check
      _
    $region23: #{tpu_custom_call.1} parent=1 // pred_check_branch
      %25 = sbr.rel (0) target = $region25
    $region24: #{tpu_custom_call.1} parent=1 // pred_region
      _
    $region25: #{tpu_custom_call.1} parent=1 // pred_fallthru
      _
    // Predicated region
    $region26: #{tpu_custom_call.1} parent=1 // pred_check
      _
    $region27: #{tpu_custom_call.1} parent=1 // pred_check_branch
      %27 = sbr.rel (0) target = $region29
    $region28: #{tpu_custom_call.1} parent=1 // pred_region
      _
    $region29: #{tpu_custom_call.1} parent=1 // pred_fallthru
      _
    // Predicated region
    $region30: #{tpu_custom_call.1} parent=1 // pred_check
      _
    $region31: #{tpu_custom_call.1} parent=1 // pred_check_branch
      %29 = sbr.rel (0) target = $region33
    $region32: #{tpu_custom_call.1} parent=1 // pred_region
      _
    $region33: #{tpu_custom_call.1} parent=1 // pred_fallthru
      _
    %v31 = vld [vmem:[%s0] sm:$0xff]
    %v32 = vpack.c.bf16 %v31, %v31
    %v33 = vld [vmem:[%s2] sm:$0xf]
    %v34 = vld [vmem:[%s2 + $0x4] sm:$0xf]
    %v35 = vld [vmem:[%s2 + $0x8] sm:$0xf]
    %v36 = vld [vmem:[%s2 + $0xc] sm:$0xf]
    %v37 = vld [vmem:[%s2 + $0x10] sm:$0xf]
    %v38 = vld [vmem:[%s2 + $0x14] sm:$0xf]
    %v39 = vld [vmem:[%s2 + $0x18] sm:$0xf]
    %v40 = vld [vmem:[%s2 + $0x1c] sm:$0xf]
    %v41 = vld [vmem:[%s2 + $0x20] sm:$0x7]
    %v51 = vunpack.c.l.b16 %v33
    %v52 = vunpack.c.l.b16 %v34
    %v53 = vunpack.c.l.b16 %v35
    %v54 = vunpack.c.l.b16 %v36
    %v55 = vunpack.c.l.b16 %v37
    %v56 = vunpack.c.l.b16 %v38
    %v57 = vunpack.c.l.b16 %v39
    %v58 = vunpack.c.l.b16 %v40
    %v59 = vunpack.c.l.b16 %v41
    %v60 = vpack.c.b16 %v52, %v51
    %v61 = vpack.c.b16 %v54, %v53
    %v62 = vpack.c.b16 %v56, %v55
    %v63 = vpack.c.b16 %v58, %v57
    %v64 = vpack.c.b16 %v59, %v59
    %vm69 = vcmask 572416
    %v71 = vsel %vm69, %v32, 0
    %vm73 = vcmask 1042432
    %v75 = vsel %vm73, %v64, 0
    %77 = vmatprep.subr.bf16.mxu0 0
    %78 = vmatpush1.bf16.msra.mxu0 %v60
    %79 = vmatprep.subr.bf16.mxu0 0
    %80 = vmatpush1.bf16.msra.mxu0 %v61
    %81 = vmatprep.subr.bf16.mxu0 0
    %82 = vmatpush1.bf16.msra.mxu0 %v62
    %83 = vmatprep.subr.bf16.mxu0 0
    %84 = vmatpush1.bf16.msra.mxu0 %v63
    %85 = vmatprep.subr.bf16.mxu0 0
    %86 = vmatpush1.bf16.msra.mxu0 %v75
    %87 = vmatprep.subr.bf16.mxu0 0
    %88 = vmatpush1.bf16.msra.mxu0 0
    %89 = vmatprep.subr.bf16.mxu0 0
    %90 = vmatpush1.bf16.msra.mxu0 0
    %91 = vmatprep.subr.bf16.mxu0 0
    %92 = vmatpush1.bf16.msra.mxu0 0
    %93 = vmatprep.subr.bf16.mxu0 0
    %94 = vmatpush1.bf16.msra.mxu0 0
    %95 = vmatprep.subr.bf16.mxu0 0
    %96 = vmatpush1.bf16.msra.mxu0 0
    %97 = vmatprep.subr.bf16.mxu0 0
    %98 = vmatpush1.bf16.msra.mxu0 0
    %99 = vmatprep.subr.bf16.mxu0 0
    %100 = vmatpush1.bf16.msra.mxu0 0
    %101 = vmatprep.subr.bf16.mxu0 0
    %102 = vmatpush1.bf16.msra.mxu0 0
    %103 = vmatprep.subr.bf16.mxu0 0
    %104 = vmatpush1.bf16.msra.mxu0 0
    %105 = vmatprep.subr.bf16.mxu0 0
    %106 = vmatpush1.bf16.msra.mxu0 0
    %107 = vmatprep.subr.bf16.mxu0 0
    %108 = vmatpush1.bf16.msra.mxu0 0
    %109 = vmatprep.mubr.bf16.mxu0 0
    %110 = vmatmul.mubr.bf16.gmra.mrb[0].mxu0 %v71
    %v111 = vpop.f32.mrb[0].mxu0
    %v112 = vadd.f32 0.0, %v111
    %v113 = vpop.f32.mrb[0].mxu0
    %v114 = vpop.f32.mrb[0].mxu0
    %v115 = vpop.f32.mrb[0].mxu0
    %116 = vdwg.mxu0
    %v117 = vld [vmem:[%s7] sm:$0x1]
    %v118 = vld [vmem:[%s7 + $0x1] sm:$0x1]
    %vm119 = vcmask 261120
    %v120 = vsel %vm119, %v112, 0.0
    %v121 = vrot.slane %v120, 4
    %v122 = vadd.f32 %v120, %v121
    %v123 = vrot.slane %v122, 2
    %v124 = vadd.f32 %v122, %v123
    %v125 = vrot.slane %v124, 1
    %v126 = vadd.f32 %v124, %v125
    %v127 = vrcp.pop 8.0
    %v128 = vmul.f32 %v126, %v127
    %v129 = vsub.f32 %v112, %v128
    %v130 = vmul.f32 %v129, %v129
    %v131 = vsel %vm119, %v130, 0.0
    %v132 = vrot.slane %v131, 4
    %v133 = vadd.f32 %v131, %v132
    %v134 = vrot.slane %v133, 2
    %v135 = vadd.f32 %v133, %v134
    %v136 = vrot.slane %v135, 1
    %v137 = vadd.f32 %v135, %v136
    %v138 = vmul.f32 %v137, %v127
    %v139 = vadd.f32 %v138, 1e-05
    %v140 = vrsqrt.pop %v139
    %v141 = vmul.f32 %v117, %v140
    %v142 = vlaneseq
    %v143 = vshrl.u32 %v142, 7
    %v144 = vsub.s32 0, %v143
    %v145 = vrot.slane %v141, %v144
    %v146 = vmul.f32 %v129, %v145
    %v147 = vlaneseq
    %v148 = vshrl.u32 %v147, 7
    %v149 = vsub.s32 0, %v148
    %v150 = vrot.slane %v118, %v149
    %v151 = vadd.f32 %v146, %v150
    %v152 = vmax.f32 %v151, 0.0
    %v153 = vpack.c.bf16 %v152, %v152
    %v154 = vld [vmem:[%s3] sm:$0xf]
    %v155 = vld [vmem:[%s3 + $0x4] sm:$0xf]
    %v156 = vld [vmem:[%s3 + $0x8] sm:$0xf]
    %v157 = vld [vmem:[%s3 + $0xc] sm:$0xf]
    %v162 = vunpack.c.l.b16 %v154
    %v163 = vunpack.c.l.b16 %v155
    %v164 = vunpack.c.l.b16 %v156
    %v165 = vunpack.c.l.b16 %v157
    %v166 = vpack.c.b16 %v163, %v162
    %v167 = vpack.c.b16 %v165, %v164
    %v171 = vsel %vm119, %v153, 0
    %173 = vmatprep.subr.bf16.mxu0 0
    %174 = vmatpush1.bf16.msra.mxu0 %v166
    %175 = vmatprep.subr.bf16.mxu0 0
    %176 = vmatpush1.bf16.msra.mxu0 %v167
    %177 = vmatprep.subr.bf16.mxu0 0
    %178 = vmatpush1.bf16.msra.mxu0 0
    %179 = vmatprep.subr.bf16.mxu0 0
    %180 = vmatpush1.bf16.msra.mxu0 0
    %181 = vmatprep.subr.bf16.mxu0 0
    %182 = vmatpush1.bf16.msra.mxu0 0
    %183 = vmatprep.subr.bf16.mxu0 0
    %184 = vmatpush1.bf16.msra.mxu0 0
    %185 = vmatprep.subr.bf16.mxu0 0
    %186 = vmatpush1.bf16.msra.mxu0 0
    %187 = vmatprep.subr.bf16.mxu0 0
    %188 = vmatpush1.bf16.msra.mxu0 0
    %189 = vmatprep.subr.bf16.mxu0 0
    %190 = vmatpush1.bf16.msra.mxu0 0
    %191 = vmatprep.subr.bf16.mxu0 0
    %192 = vmatpush1.bf16.msra.mxu0 0
    %193 = vmatprep.subr.bf16.mxu0 0
    %194 = vmatpush1.bf16.msra.mxu0 0
    %195 = vmatprep.subr.bf16.mxu0 0
    %196 = vmatpush1.bf16.msra.mxu0 0
    %197 = vmatprep.subr.bf16.mxu0 0
    %198 = vmatpush1.bf16.msra.mxu0 0
    %199 = vmatprep.subr.bf16.mxu0 0
    %200 = vmatpush1.bf16.msra.mxu0 0
    %201 = vmatprep.subr.bf16.mxu0 0
    %202 = vmatpush1.bf16.msra.mxu0 0
    %203 = vmatprep.subr.bf16.mxu0 0
    %204 = vmatpush1.bf16.msra.mxu0 0
    %205 = vmatprep.mubr.bf16.mxu0 0
    %206 = vmatmul.mubr.bf16.gmra.mrb[0].mxu0 %v171
    %v207 = vpop.f32.mrb[0].mxu0
    %v208 = vadd.f32 0.0, %v207
    %v209 = vpop.f32.mrb[0].mxu0
    %v210 = vpop.f32.mrb[0].mxu0
    %v211 = vpop.f32.mrb[0].mxu0
    %212 = vdwg.mxu0
    %v213 = vld [vmem:[%s7 + $0x2] sm:$0x1]
    %v214 = vld [vmem:[%s7 + $0x3] sm:$0x1]
    %v215 = vsel %vm119, %v208, 0.0
    %v216 = vrot.slane %v215, 4
    %v217 = vadd.f32 %v215, %v216
    %v218 = vrot.slane %v217, 2
    %v219 = vadd.f32 %v217, %v218
    %v220 = vrot.slane %v219, 1
    %v221 = vadd.f32 %v219, %v220
    %v222 = vmul.f32 %v221, %v127
    %v223 = vsub.f32 %v208, %v222
    %v224 = vmul.f32 %v223, %v223
    %v225 = vsel %vm119, %v224, 0.0
    %v226 = vrot.slane %v225, 4
    %v227 = vadd.f32 %v225, %v226
    %v228 = vrot.slane %v227, 2
    %v229 = vadd.f32 %v227, %v228
    %v230 = vrot.slane %v229, 1
    %v231 = vadd.f32 %v229, %v230
    %v232 = vmul.f32 %v231, %v127
    %v233 = vadd.f32 %v232, 1e-05
    %v234 = vrsqrt.pop %v233
    %v235 = vmul.f32 %v213, %v234
    %v236 = vlaneseq
    %v237 = vshrl.u32 %v236, 7
    %v238 = vsub.s32 0, %v237
    %v239 = vrot.slane %v235, %v238
    %v240 = vmul.f32 %v223, %v239
    %v241 = vlaneseq
    %v242 = vshrl.u32 %v241, 7
    %v243 = vsub.s32 0, %v242
    %v244 = vrot.slane %v214, %v243
    %v245 = vadd.f32 %v240, %v244
    %v246 = vmax.f32 %v245, 0.0
    %v247 = vpack.c.bf16 %v246, %v246
    %v248 = vld [vmem:[%s4] sm:$0xf]
    %v249 = vld [vmem:[%s4 + $0x4] sm:$0xf]
    %v250 = vld [vmem:[%s4 + $0x8] sm:$0xf]
    %v251 = vld [vmem:[%s4 + $0xc] sm:$0xf]
    %v256 = vunpack.c.l.b16 %v248
    %v257 = vunpack.c.l.b16 %v249
    %v258 = vunpack.c.l.b16 %v250
    %v259 = vunpack.c.l.b16 %v251
    %v260 = vpack.c.b16 %v257, %v256
    %v261 = vpack.c.b16 %v259, %v258
    %v265 = vsel %vm119, %v247, 0
    %267 = vmatprep.subr.bf16.mxu0 0
    %268 = vmatpush1.bf16.msra.mxu0 %v260
    %269 = vmatprep.subr.bf16.mxu0 0
    %270 = vmatpush1.bf16.msra.mxu0 %v261
    %271 = vmatprep.subr.bf16.mxu0 0
    %272 = vmatpush1.bf16.msra.mxu0 0
    %273 = vmatprep.subr.bf16.mxu0 0
    %274 = vmatpush1.bf16.msra.mxu0 0
    %275 = vmatprep.subr.bf16.mxu0 0
    %276 = vmatpush1.bf16.msra.mxu0 0
    %277 = vmatprep.subr.bf16.mxu0 0
    %278 = vmatpush1.bf16.msra.mxu0 0
    %279 = vmatprep.subr.bf16.mxu0 0
    %280 = vmatpush1.bf16.msra.mxu0 0
    %281 = vmatprep.subr.bf16.mxu0 0
    %282 = vmatpush1.bf16.msra.mxu0 0
    %283 = vmatprep.subr.bf16.mxu0 0
    %284 = vmatpush1.bf16.msra.mxu0 0
    %285 = vmatprep.subr.bf16.mxu0 0
    %286 = vmatpush1.bf16.msra.mxu0 0
    %287 = vmatprep.subr.bf16.mxu0 0
    %288 = vmatpush1.bf16.msra.mxu0 0
    %289 = vmatprep.subr.bf16.mxu0 0
    %290 = vmatpush1.bf16.msra.mxu0 0
    %291 = vmatprep.subr.bf16.mxu0 0
    %292 = vmatpush1.bf16.msra.mxu0 0
    %293 = vmatprep.subr.bf16.mxu0 0
    %294 = vmatpush1.bf16.msra.mxu0 0
    %295 = vmatprep.subr.bf16.mxu0 0
    %296 = vmatpush1.bf16.msra.mxu0 0
    %297 = vmatprep.subr.bf16.mxu0 0
    %298 = vmatpush1.bf16.msra.mxu0 0
    %299 = vmatprep.mubr.bf16.mxu0 0
    %300 = vmatmul.mubr.bf16.gmra.mrb[0].mxu0 %v265
    %v301 = vpop.f32.mrb[0].mxu0
    %v302 = vadd.f32 0.0, %v301
    %v303 = vpop.f32.mrb[0].mxu0
    %v304 = vpop.f32.mrb[0].mxu0
    %v305 = vpop.f32.mrb[0].mxu0
    %306 = vdwg.mxu0
    %v307 = vld [vmem:[%s7 + $0x4] sm:$0x1]
    %v308 = vld [vmem:[%s7 + $0x5] sm:$0x1]
    %vm309 = vcmask 130048
    %v310 = vsel %vm309, %v302, 0.0
    %v311 = vrot.slane %v310, 4
    %v312 = vadd.f32 %v310, %v311
    %v313 = vrot.slane %v312, 2
    %v314 = vadd.f32 %v312, %v313
    %v315 = vrot.slane %v314, 1
    %v316 = vadd.f32 %v314, %v315
    %v317 = vmul.f32 %v316, %v127
    %v318 = vsub.f32 %v302, %v317
    %v319 = vmul.f32 %v318, %v318
    %v320 = vsel %vm309, %v319, 0.0
    %v321 = vrot.slane %v320, 4
    %v322 = vadd.f32 %v320, %v321
    %v323 = vrot.slane %v322, 2
    %v324 = vadd.f32 %v322, %v323
    %v325 = vrot.slane %v324, 1
    %v326 = vadd.f32 %v324, %v325
    %v327 = vmul.f32 %v326, %v127
    %v328 = vadd.f32 %v327, 1e-05
    %v329 = vrsqrt.pop %v328
    %v330 = vmul.f32 %v307, %v329
    %v331 = vlaneseq
    %v332 = vshrl.u32 %v331, 7
    %v333 = vsub.s32 0, %v332
    %v334 = vrot.slane %v330, %v333
    %v335 = vmul.f32 %v318, %v334
    %v336 = vlaneseq
    %v337 = vshrl.u32 %v336, 7
    %v338 = vsub.s32 0, %v337
    %v339 = vrot.slane %v308, %v338
    %v340 = vadd.f32 %v335, %v339
    %v341 = vmax.f32 %v340, 0.0
    %v342 = vpack.c.bf16 %v341, %v341
    %v343 = vld [vmem:[%s5] sm:$0xf]
    %v344 = vld [vmem:[%s5 + $0x4] sm:$0xf]
    %v347 = vunpack.c.l.b16 %v343
    %v348 = vunpack.c.l.b16 %v344
    %v349 = vpack.c.b16 %v348, %v347
    %v352 = vsel %vm309, %v342, 0
    %354 = vmatprep.subr.bf16.mxu0 0
    %355 = vmatpush1.bf16.msra.mxu0 %v349
    %356 = vmatprep.subr.bf16.mxu0 0
    %357 = vmatpush1.bf16.msra.mxu0 0
    %358 = vmatprep.subr.bf16.mxu0 0
    %359 = vmatpush1.bf16.msra.mxu0 0
    %360 = vmatprep.subr.bf16.mxu0 0
    %361 = vmatpush1.bf16.msra.mxu0 0
    %362 = vmatprep.subr.bf16.mxu0 0
    %363 = vmatpush1.bf16.msra.mxu0 0
    %364 = vmatprep.subr.bf16.mxu0 0
    %365 = vmatpush1.bf16.msra.mxu0 0
    %366 = vmatprep.subr.bf16.mxu0 0
    %367 = vmatpush1.bf16.msra.mxu0 0
    %368 = vmatprep.subr.bf16.mxu0 0
    %369 = vmatpush1.bf16.msra.mxu0 0
    %370 = vmatprep.subr.bf16.mxu0 0
    %371 = vmatpush1.bf16.msra.mxu0 0
    %372 = vmatprep.subr.bf16.mxu0 0
    %373 = vmatpush1.bf16.msra.mxu0 0
    %374 = vmatprep.subr.bf16.mxu0 0
    %375 = vmatpush1.bf16.msra.mxu0 0
    %376 = vmatprep.subr.bf16.mxu0 0
    %377 = vmatpush1.bf16.msra.mxu0 0
    %378 = vmatprep.subr.bf16.mxu0 0
    %379 = vmatpush1.bf16.msra.mxu0 0
    %380 = vmatprep.subr.bf16.mxu0 0
    %381 = vmatpush1.bf16.msra.mxu0 0
    %382 = vmatprep.subr.bf16.mxu0 0
    %383 = vmatpush1.bf16.msra.mxu0 0
    %384 = vmatprep.subr.bf16.mxu0 0
    %385 = vmatpush1.bf16.msra.mxu0 0
    %386 = vmatprep.mubr.bf16.mxu0 0
    %387 = vmatmul.mubr.bf16.gmra.mrb[0].mxu0 %v352
    %v388 = vpop.f32.mrb[0].mxu0
    %v389 = vadd.f32 0.0, %v388
    %v390 = vpop.f32.mrb[0].mxu0
    %v391 = vpop.f32.mrb[0].mxu0
    %v392 = vpop.f32.mrb[0].mxu0
    %393 = vdwg.mxu0
    %v394 = vld [vmem:[%s7 + $0x6] sm:$0x1]
    %v395 = vld [vmem:[%s7 + $0x7] sm:$0x1]
    %v396 = vsel %vm309, %v389, 0.0
    %v397 = vrot.slane %v396, 4
    %v398 = vadd.f32 %v396, %v397
    %v399 = vrot.slane %v398, 2
    %v400 = vadd.f32 %v398, %v399
    %v401 = vrot.slane %v400, 1
    %v402 = vadd.f32 %v400, %v401
    %v403 = vmul.f32 %v402, %v127
    %v404 = vsub.f32 %v389, %v403
    %v405 = vmul.f32 %v404, %v404
    %v406 = vsel %vm309, %v405, 0.0
    %v407 = vrot.slane %v406, 4
    %v408 = vadd.f32 %v406, %v407
    %v409 = vrot.slane %v408, 2
    %v410 = vadd.f32 %v408, %v409
    %v411 = vrot.slane %v410, 1
    %v412 = vadd.f32 %v410, %v411
    %v413 = vmul.f32 %v412, %v127
    %v414 = vadd.f32 %v413, 1e-05
    %v415 = vrsqrt.pop %v414
    %v416 = vmul.f32 %v394, %v415
    %v417 = vlaneseq
    %v418 = vshrl.u32 %v417, 7
    %v419 = vsub.s32 0, %v418
    %v420 = vrot.slane %v416, %v419
    %v421 = vmul.f32 %v404, %v420
    %v422 = vlaneseq
    %v423 = vshrl.u32 %v422, 7
    %v424 = vsub.s32 0, %v423
    %v425 = vrot.slane %v395, %v424
    %v426 = vadd.f32 %v421, %v425
    %v427 = vmax.f32 %v426, 0.0
    %v428 = vld [vmem:[%s7 + $0x8] sm:$0x1]
    %v429 = vpack.c.bf16 %v427, %v427
    %v430 = vld [vmem:[%s6] sm:$0xf]
    %v431 = vld [vmem:[%s6 + $0x4] sm:$0xf]
    %v432 = vlaneseq
    %v433 = vshrl.u32 %v432, 7
    %v434 = vsub.s32 0, %v433
    %v435 = vrot.slane %v428, %v434
    %v438 = vunpack.c.l.b16 %v430
    %v439 = vunpack.c.l.b16 %v431
    %v440 = vpack.c.b16 %v439, %v438
    %v443 = vsel %vm309, %v429, 0
    %445 = vmatprep.subr.bf16.mxu0 0
    %446 = vmatpush1.bf16.msra.mxu0 %v440
    %447 = vmatprep.subr.bf16.mxu0 0
    %448 = vmatpush1.bf16.msra.mxu0 0
    %449 = vmatprep.subr.bf16.mxu0 0
    %450 = vmatpush1.bf16.msra.mxu0 0
    %451 = vmatprep.subr.bf16.mxu0 0
    %452 = vmatpush1.bf16.msra.mxu0 0
    %453 = vmatprep.subr.bf16.mxu0 0
    %454 = vmatpush1.bf16.msra.mxu0 0
    %455 = vmatprep.subr.bf16.mxu0 0
    %456 = vmatpush1.bf16.msra.mxu0 0
    %457 = vmatprep.subr.bf16.mxu0 0
    %458 = vmatpush1.bf16.msra.mxu0 0
    %459 = vmatprep.subr.bf16.mxu0 0
    %460 = vmatpush1.bf16.msra.mxu0 0
    %461 = vmatprep.subr.bf16.mxu0 0
    %462 = vmatpush1.bf16.msra.mxu0 0
    %463 = vmatprep.subr.bf16.mxu0 0
    %464 = vmatpush1.bf16.msra.mxu0 0
    %465 = vmatprep.subr.bf16.mxu0 0
    %466 = vmatpush1.bf16.msra.mxu0 0
    %467 = vmatprep.subr.bf16.mxu0 0
    %468 = vmatpush1.bf16.msra.mxu0 0
    %469 = vmatprep.subr.bf16.mxu0 0
    %470 = vmatpush1.bf16.msra.mxu0 0
    %471 = vmatprep.subr.bf16.mxu0 0
    %472 = vmatpush1.bf16.msra.mxu0 0
    %473 = vmatprep.subr.bf16.mxu0 0
    %474 = vmatpush1.bf16.msra.mxu0 0
    %475 = vmatprep.subr.bf16.mxu0 0
    %476 = vmatpush1.bf16.msra.mxu0 0
    %477 = vmatprep.mubr.bf16.mxu0 0
    %478 = vmatmul.mubr.bf16.gmra.mrb[0].mxu0 %v443
    %v479 = vpop.f32.mrb[0].mxu0
    %v480 = vadd.f32 %v435, %v479
    %v481 = vpop.f32.mrb[0].mxu0
    %v482 = vpop.f32.mrb[0].mxu0
    %v483 = vpop.f32.mrb[0].mxu0
    %484 = vdwg.mxu0
    %v485 = vmul.f32 %v480, 0.5
    %v486 = vmul.f32 %v485, 1.442695
    %v487 = vpow.pop %v486
    %v488 = vld [vmem:[%s1] sm:$0xff]
    %490 = vrot.lane.b32.xlu0 %v487, 98
    %v491 = vpop.permute.xlu0 %490
    %v493 = vmul.f32 %v488, %v491
    %v494 = vadd.f32 %v493, %v480
    %496 = vrot.lane.b32.xlu0 %v480, 30
    %v497 = vpop.permute.xlu0 %496
    %vm499 = vcmask 244736
    %v500 = vsel %vm499, %v494, %v497
    %vm501 = vcmask 736256
    %v502 = vsel %vm501, %v500, 0.0
    %503 = vst [vmem:[#allocation2] sm:$0xff] %v502
    // Predicated region
    $region34: #{tpu_custom_call.1} parent=1 // pred_check
      _
    $region35: #{tpu_custom_call.1} parent=1 // pred_check_branch
      %505 = sbr.rel (0) target = $region37
    $region36: #{tpu_custom_call.1} parent=1 // pred_region
      %s507 = ssub.s32 128, 128
      %508 = vsyncadd [#allocation3], %s507
      %s510 = sshll.u32 [#allocation2], 4
      %s511 = int_to_ptr.vmem [resolvable:$true] %s510
      %513 = dma.vmem_to_hbm [thread:$0]  %s511, 128, %s8, [#allocation3]
    $region37: #{tpu_custom_call.1} parent=1 // pred_fallthru
      _
    // Predicated region
    $region38: #{tpu_custom_call.1} parent=1 // pred_check
      _
    $region39: #{tpu_custom_call.1} parent=1 // pred_check_branch
      %515 = sbr.rel (0) target = $region41
    $region40: #{tpu_custom_call.1} parent=1 // pred_region
      %516 = dma.done [#allocation3], 128
    $region41: #{tpu_custom_call.1} parent=1 // pred_fallthru
      _
    %517 = vsyncpa [#allocation3], 1

</llo_original>
